<compile_context>
chip_gen: v7x
topology: tpu7x:2x2x1
jax: 0.10.0
libtpu: 0.0.40
codegen_flags: <defaults>
</compile_context>

<pallas_src>
import functools

import jax
import jax.numpy as jnp
from jax.experimental import pallas as pl
from jax.experimental.pallas import tpu as pltpu

_LANE = 1024                    # lane-dense last dim (multiple of 128)
_TILE_R = 512                   # rows per tile: 512*1024*4B = 2 MiB f32/operand
_SMALL_BYTES = 64 * 1024        # below this, plain jnp is strictly better


# ----------------------------- kernels --------------------------------------
def _tanh_kernel(x_ref, o_ref):
    # Elementwise hot path: tanh lowers to the EUP transcendental unit.
    x = x_ref[...].astype(jnp.float32)
    o_ref[...] = jnp.tanh(x).astype(o_ref.dtype)


def _tanh_bwd_kernel(g_ref, y_ref, o_ref):
    # grad_in = grad_out * (1 - out*out), computed in f32 for precision.
    g = g_ref[...].astype(jnp.float32)
    y = y_ref[...].astype(jnp.float32)
    o_ref[...] = (g * (1.0 - y * y)).astype(o_ref.dtype)


# --------------------------- wrapper helpers ---------------------------------
def _to_lane_dense(flat: jax.Array):
    """Pad a flat array and view it as (rows, _LANE) with rows % tile_r == 0."""
    n = flat.shape[0]
    rows = pl.cdiv(n, _LANE)
    tile_r = min(_TILE_R, rows)
    rows_padded = pl.cdiv(rows, tile_r) * tile_r
    total = rows_padded * _LANE
    if total != n:
        flat = jnp.pad(flat, (0, total - n))
    return flat.reshape(rows_padded, _LANE), tile_r, rows_padded // tile_r


def _elementwise_call(kernel, arrays, out_dtype, tile_r, grid, n_operands):
    rows, lane = arrays[0].shape
    spec = pl.BlockSpec((tile_r, lane), lambda i: (i, 0))
    # VMEM budget: (inputs + output) x 2 pipeline buffers x tile bytes + slack.
    tile_bytes = tile_r * lane * 4
    vmem_limit = min(n_operands * 2 * tile_bytes + (4 << 20), 48 << 20)
    return pl.pallas_call(
        kernel,
        out_shape=jax.ShapeDtypeStruct((rows, lane), out_dtype),
        grid=(grid,),
        in_specs=[spec] * len(arrays),
        out_specs=spec,
        compiler_params=pltpu.CompilerParams(
            dimension_semantics=("parallel",),
            vmem_limit_bytes=vmem_limit,
        ),
    )(*arrays)


# ------------------------------ public API -----------------------------------
def tanh_forward(x: jax.Array, *, force_pallas: bool = False) -> jax.Array:
    """Forward of the Tanh module: out = tanh(x), same shape/dtype as x."""
    nbytes = x.size * x.dtype.itemsize
    if nbytes < _SMALL_BYTES and not force_pallas:
        return jnp.tanh(x)  # launch overhead dwarfs the work for tiny inputs

    flat = x.reshape(-1)
    x2d, tile_r, grid = _to_lane_dense(flat)
    out2d = _elementwise_call(_tanh_kernel, [x2d], x.dtype, tile_r, grid,
                              n_operands=2)
    return out2d.reshape(-1)[: flat.shape[0]].reshape(x.shape)


def tanh_backward(grad_output: jax.Array, saved_output: jax.Array,
                  *, force_pallas: bool = False) -> jax.Array:
    """Backward of the Tanh module: grad_in = grad_out * (1 - out*out)."""
    nbytes = grad_output.size * grad_output.dtype.itemsize
    if nbytes < _SMALL_BYTES and not force_pallas:
        y32 = saved_output.astype(jnp.float32)
        return (grad_output.astype(jnp.float32) * (1.0 - y32 * y32)).astype(
            grad_output.dtype)

    flat_g = grad_output.reshape(-1)
    g2d, tile_r, grid = _to_lane_dense(flat_g)
    y2d, _, _ = _to_lane_dense(saved_output.reshape(-1))
    out2d = _elementwise_call(_tanh_bwd_kernel, [g2d, y2d],
                              grad_output.dtype, tile_r, grid, n_operands=3)
    return out2d.reshape(-1)[: flat_g.shape[0]].reshape(grad_output.shape)


# -------------------------------- demo ---------------------------------------
if __name__ == "__main__":
    # Module is Tanh(input_size=hidden); no learnable parameters (param() == []).
    batch, hidden = 2, 32
    key = jax.random.PRNGKey(0)
    x = jax.random.normal(key, (batch, hidden), dtype=jnp.float32)
    g = jax.random.normal(jax.random.PRNGKey(1), (batch, hidden),
                          dtype=jnp.float32)

    ref_out = jnp.tanh(x)
    ref_grad = g * (1.0 - ref_out * ref_out)

    # 1) Default dispatch at the tiny demo shape (falls back to fused XLA).
    out_small = jax.block_until_ready(tanh_forward(x))
    assert out_small.shape == x.shape and out_small.dtype == x.dtype
    assert jnp.max(jnp.abs(out_small - ref_out)) < 1e-6

    # 2) Force the Pallas path at the same shape (exercises lane-dense padding).
    out_pl = jax.block_until_ready(tanh_forward(x, force_pallas=True))
    assert jnp.max(jnp.abs(out_pl - ref_out)) < 1e-6
    gi_pl = jax.block_until_ready(
        tanh_backward(g, out_pl, force_pallas=True))
    assert jnp.max(jnp.abs(gi_pl - ref_grad)) < 1e-6

    # 3) A multi-tile shape so the grid / pipelining actually iterates.
    xb = jax.random.normal(jax.random.PRNGKey(2), (1024, 2048),
                           dtype=jnp.float32)  # 8 MiB -> 4 grid steps
    gb = jax.random.normal(jax.random.PRNGKey(3), xb.shape, dtype=jnp.float32)
    out_big = jax.block_until_ready(tanh_forward(xb))
    ref_big = jnp.tanh(xb)
    assert jnp.max(jnp.abs(out_big - ref_big)) < 1e-6
    gi_big = jax.block_until_ready(tanh_backward(gb, out_big))
    assert jnp.max(jnp.abs(gi_big - gb * (1.0 - ref_big * ref_big))) < 1e-5

    print("KERNEL_OK")
</pallas_src>

<mosaic_0001>
module attributes {stable_mosaic.version = 11 : i64} {
  func.func @_tanh_kernel(%arg0: i32, %arg1: memref<1x1024xf32, #tpu.memory_space<vmem>>, %arg2: memref<1x1024xf32, #tpu.memory_space<vmem>>) attributes {dimension_semantics = [#tpu.dimension_semantics<parallel>], iteration_bounds = array<i64: 1>, scalar_prefetch = 0 : i64, scratch_operands = 0 : i64, tpu.core_type = #tpu.core_type<tc>, window_params = [{transform_indices = @transform_0, window_bounds = array<i64: 1, 1024>}, {transform_indices = @transform_1, window_bounds = array<i64: 1, 1024>}]} {
    %c0 = arith.constant 0 : index
    %c0_0 = arith.constant 0 : index
    %0 = vector.load %arg1[%c0, %c0_0] : memref<1x1024xf32, #tpu.memory_space<vmem>>, vector<1x1024xf32>
    %1 = math.tanh %0 : vector<1x1024xf32>
    %c0_1 = arith.constant 0 : index
    %c0_2 = arith.constant 0 : index
    %2 = vector.load %arg2[%c0_1, %c0_2] : memref<1x1024xf32, #tpu.memory_space<vmem>>, vector<1x1024xf32>
    tpu.vector_store %arg2[%c0_1, %c0_2], %1 {strides = array<i32>} : memref<1x1024xf32, #tpu.memory_space<vmem>>, vector<1x1024xf32>,
    return
  }
  func.func @transform_0(%arg0: i32) -> (i32, i32) {
    %c0_i32 = arith.constant 0 : i32
    %c0_i32_0 = arith.constant 0 : i32
    return %arg0, %c0_i32 : i32, i32
  }
  func.func @transform_1(%arg0: i32) -> (i32, i32) {
    %c0_i32 = arith.constant 0 : i32
    %c0_i32_0 = arith.constant 0 : i32
    return %arg0, %c0_i32 : i32, i32
  }
}

</mosaic_0001>

<llo_original>
// kernel: tpu_custom_call.1
$region0: #{tpu_custom_call.1}
  #allocation0 [shape = 'u32[]', space=smem, size = 0x4, offset = 0x4, fixed_abs, tag = 'smem constant byte address 0x4 - core index']
  #allocation1 [shape = 'u32[144,128]{1,0:T(1,128)}', space=vmem, size = 0x12000, scoped, tag = 'internal scratch']
  %s0 = inlined_call_operand.hbm [shape: f32[1,1024], index: 0, kind: input, shape index: {}]
  %s1 = inlined_call_operand.hbm [shape: f32[1,1024], index: 1, kind: output, shape index: {}]
  %s2 = sld [smem:[#allocation0]]
  $region18: #{tpu_custom_call.1} parent=0
    _
  %s4 = ssub.s32 1, %s2
  %s5 = scalar_select 0, %s4, %s2
  $region1: #{tpu_custom_call.1} parent=0
    #allocation2 [shape = 'u8[4096]{0}', space=vmem, size = 0x1000, scoped, tag = 'input window, operand 0, single buffered']
    #allocation3 [shape = 's32[1]{0}', space=sflag, size = 0x4, scoped, tag = 'scoped memory for tpu_custom_call.1']
    #allocation4 [shape = 's32[1]{0}', space=sflag, size = 0x4, scoped, tag = 'scoped memory for tpu_custom_call.1']
    #allocation5 [shape = 'u8[4096]{0}', space=vmem, size = 0x1000, scoped, tag = 'output window, operand 0, single buffered']
    %6 = vsyncpa [#allocation3], 0
    %7 = vsyncpa [#allocation4], 0
    // Predicated region
    $region2: #{tpu_custom_call.1} parent=1 // pred_check
      _
    $region3: #{tpu_custom_call.1} parent=1 // pred_check_branch
      %9 = sbr.rel (0) target = $region5
    $region4: #{tpu_custom_call.1} parent=1 // pred_region
      %s11 = ssub.s32 128, 128
      %12 = vsyncadd [#allocation3], %s11
      %s14 = sshll.u32 [#allocation2], 4
      %s15 = int_to_ptr.vmem [resolvable:$true] %s14
      %17 = dma.hbm_to_vmem [thread:$0]  %s0, 128, %s15, [#allocation3]
    $region5: #{tpu_custom_call.1} parent=1 // pred_fallthru
      _
    // Predicated region
    $region6: #{tpu_custom_call.1} parent=1 // pred_check
      _
    $region7: #{tpu_custom_call.1} parent=1 // pred_check_branch
      %19 = sbr.rel (0) target = $region9
    $region8: #{tpu_custom_call.1} parent=1 // pred_region
      %20 = dma.done [#allocation3], 128
    $region9: #{tpu_custom_call.1} parent=1 // pred_fallthru
      _
    %v21 = vld [vmem:[#allocation2] sm:$0xff]
    %v22 = vtanh.pop %v21
    %23 = vst [vmem:[#allocation5] sm:$0xff] %v22
    // Predicated region
    $region10: #{tpu_custom_call.1} parent=1 // pred_check
      _
    $region11: #{tpu_custom_call.1} parent=1 // pred_check_branch
      %25 = sbr.rel (0) target = $region13
    $region12: #{tpu_custom_call.1} parent=1 // pred_region
      %s27 = ssub.s32 128, 128
      %28 = vsyncadd [#allocation4], %s27
      %s30 = sshll.u32 [#allocation5], 4
      %s31 = int_to_ptr.vmem [resolvable:$true] %s30
      %33 = dma.vmem_to_hbm [thread:$0]  %s31, 128, %s1, [#allocation4]
    $region13: #{tpu_custom_call.1} parent=1 // pred_fallthru
      _
    // Predicated region
    $region14: #{tpu_custom_call.1} parent=1 // pred_check
      _
    $region15: #{tpu_custom_call.1} parent=1 // pred_check_branch
      %35 = sbr.rel (0) target = $region17
    $region16: #{tpu_custom_call.1} parent=1 // pred_region
      %36 = dma.done [#allocation4], 128
    $region17: #{tpu_custom_call.1} parent=1 // pred_fallthru
      _
    %37 = vsyncpa [#allocation3], 1
    %38 = vsyncpa [#allocation4], 1

</llo_original>
